<compile_context>
chip_gen: v7x
topology: tpu7x:2x2x1
jax: 0.10.0
libtpu: 0.0.40
codegen_flags: <defaults>
</compile_context>

<pallas_src>
import jax
import jax.numpy as jnp
from jax.experimental import pallas as pl
from jax.experimental.pallas import tpu as pltpu

NEG_SLOPE = 0.2     # GATConv default negative_slope
NEG_INF = -1e30

F_IN, F1, F2 = 11, 16, 64   # GATConv(11,16), GATConv(16,64)
F_IN_PAD = 16               # x features zero-padded to a multiple of 8

# Packed parameter-slab row layout (8-sublane aligned, 128-lane rows):
#   rows  0:16   [w1^T | w1^T ad1^T | w1^T as1^T]   (rows 11:16 zero)
#   rows 16:32   [w2^T | w2^T ad2^T | w2^T as2^T]
#   rows 32:96   wl^T  [64, out_pad]
#   row  96      b1,  row 97  b2,  row 98  bl
SLAB_ROWS = 104


def _gat_layer(h_in, wb, f_out, m_cnt, mask_bias, bias):
    """Single-head GATConv (heads=1, concat=True), eval mode.

    h_in      : [N, F_in_pad]
    wb        : [F_in_pad, 128]  fused [w^T | w^T a_dst^T | w^T a_src^T] (zero-padded)
    m_cnt     : [N, N]  edge-multiplicity matrix (self-loops normalized to 1)
    mask_bias : [N, N]  additive mask: 0 where an edge (or self-loop) exists, -1e30 else
    bias      : [1, f_out]
    """
    # Single MXU push per layer: features + both attention scores.
    h_all = jnp.dot(h_in, wb, preferred_element_type=jnp.float32)      # [N, 128]
    h = h_all[:, :f_out]                                               # [N, F_out]
    d_col = h_all[:, f_out:f_out + 1]                                  # [N, 1] target term
    s_col = h_all[:, f_out + 1:f_out + 2]                              # [N, 1] source term
    s_row = jnp.transpose(s_col)                                       # [1, N] tiny transpose
    # e[i, j] = leaky_relu(a_dst.h_i + a_src.h_j) + mask
    e = d_col + s_row                                                  # [N, N]
    e = jnp.maximum(e, NEG_SLOPE * e)                                  # leaky_relu(0.2)
    e = e + mask_bias
    e = e - jnp.max(e, axis=-1, keepdims=True)
    # Multiplicity-weighted softmax over incoming edges (matches PyG per-edge
    # softmax for graphs with duplicate edges; masked entries are exactly 0).
    p = jnp.exp(e) * m_cnt                                             # [N, N]
    denom = jnp.sum(p, axis=-1, keepdims=True)                         # [N, 1]
    agg = jnp.dot(p, h, preferred_element_type=jnp.float32)            # [N, F_out]
    # TODO(synk): attention dropout (p=0.05) is identity in eval mode; training
    # mode dropout is not implemented.
    return agg / denom + bias


def gat_graphnet_kernel(x_ref, src_ref, tgt_ref, p_ref, out_ref):
    # x_ref: [N, 16]   src_ref: [E_pad, 1]   tgt_ref: [1, E_pad]
    # p_ref: [104, out_pad]   out_ref: [N, out_pad]
    n = x_ref.shape[0]
    e_pad = src_ref.shape[0]

    # ---- dense multiplicity matrix + additive mask, built in-kernel ----
    src_col = src_ref[...]                                              # [E, 1] int32
    tgt_row = tgt_ref[...]                                              # [1, E] int32
    ids_ne = jax.lax.broadcasted_iota(jnp.int32, (n, e_pad), 0)
    tgt_oh = (ids_ne == tgt_row).astype(jnp.bfloat16)                   # [N, E]
    ids_en = jax.lax.broadcasted_iota(jnp.int32, (e_pad, n), 1)
    src_oh = (ids_en == src_col).astype(jnp.bfloat16)                   # [E, N]
    # adj[i, j] = #edges with target i, source j  (standard contraction, no A@B^T)
    adj = jnp.dot(tgt_oh, src_oh, preferred_element_type=jnp.float32)   # [N, N]
    rows = jax.lax.broadcasted_iota(jnp.int32, (n, n), 0)
    cols = jax.lax.broadcasted_iota(jnp.int32, (n, n), 1)
    # PyG GATConv removes then re-adds self-loops -> diagonal count is exactly 1.
    m_cnt = jnp.where(rows == cols, 1.0, adj)                           # [N, N]
    mask_bias = jnp.where(m_cnt > 0.0, 0.0, NEG_INF)                    # [N, N]

    # ---- unpack packed parameter slab (8-row aligned, lane-dense slices) ----
    wb1 = p_ref[0:16, :]            # [16, 128]
    wb2 = p_ref[16:32, :]           # [16, 128]
    wlt = p_ref[32:96, :]           # [64, out_pad]
    b1 = p_ref[96:97, 0:F1]         # [1, 16]
    b2 = p_ref[97:98, 0:F2]         # [1, 64]
    bl = p_ref[98:99, :]            # [1, out_pad]

    x = x_ref[...]                                                      # [N, 16]

    # gat1: 11 -> 16, ReLU
    h1 = _gat_layer(x, wb1, F1, m_cnt, mask_bias, b1)
    h1 = jnp.maximum(h1, 0.0)
    # gat2: 16 -> 64
    h2 = _gat_layer(h1, wb2, F2, m_cnt, mask_bias, b2)
    # liner: 64 -> num_classes (zero-padded to a lane-dense out_pad-wide store)
    out_ref[...] = jnp.dot(h2, wlt, preferred_element_type=jnp.float32) + bl


def _pack_params(params, out_pad):
    """Pack all weights (pre-transposed, attention vectors folded in) into one slab."""
    num_classes = params['wl'].shape[0]
    w1t = params['w1'].T                              # [11, 16]
    w2t = params['w2'].T                              # [16, 64]
    wlt = params['wl'].T                              # [64, C]
    slab = jnp.zeros((SLAB_ROWS, out_pad), jnp.float32)
    # Layer-1 fused block (rows 11:16 stay zero; x is also zero-padded).
    slab = slab.at[0:F_IN, 0:F1].set(w1t)
    slab = slab.at[0:F_IN, F1:F1 + 1].set(w1t @ params['ad1'].T)
    slab = slab.at[0:F_IN, F1 + 1:F1 + 2].set(w1t @ params['as1'].T)
    # Layer-2 fused block.
    slab = slab.at[16:16 + F1, 0:F2].set(w2t)
    slab = slab.at[16:16 + F1, F2:F2 + 1].set(w2t @ params['ad2'].T)
    slab = slab.at[16:16 + F1, F2 + 1:F2 + 2].set(w2t @ params['as2'].T)
    # Final linear layer.
    slab = slab.at[32:32 + F2, 0:num_classes].set(wlt)
    # Biases.
    slab = slab.at[96, 0:F1].set(params['b1'][0])
    slab = slab.at[97, 0:F2].set(params['b2'][0])
    slab = slab.at[98, 0:num_classes].set(params['bl'][0])
    return slab


def gat_graphnet_batched(xs, edge_indices, params):
    """Batched forward: xs [G, N, 11], edge_indices [G, 2, E] (src row 0, tgt row 1).

    One pallas_call with grid=(G,) — the per-graph axis is pipelined /
    megacore-parallel instead of paying one kernel launch per tiny graph.
    For a static model/graph the slab and padded edge tensors are pure glue and
    can be cached by the caller (they are cheap jnp ops under jit regardless).
    """
    g, n, _ = xs.shape
    num_classes = params['wl'].shape[0]
    out_pad = max(128, ((num_classes + 127) // 128) * 128)

    slab = _pack_params(params, out_pad)

    # Zero-pad node features to 16 lanes (padding columns must be zero).
    x_pad = jnp.zeros((g, n, F_IN_PAD), jnp.float32).at[:, :, :F_IN].set(
        xs.astype(jnp.float32))

    # Lane-dense padded edge list, -1 sentinel (matches no node id).
    e = edge_indices.shape[2]
    e_pad = max(128, ((e + 127) // 128) * 128)
    ei = jnp.full((g, 2, e_pad), -1, jnp.int32).at[:, :, :e].set(
        edge_indices.astype(jnp.int32))
    src_col = ei[:, 0, :].reshape(g, e_pad, 1)      # [G, E_pad, 1]
    tgt_row = ei[:, 1, :].reshape(g, 1, e_pad)      # [G, 1, E_pad]

    cost = pl.CostEstimate(
        flops=int(g * (2 * n * n * e_pad                      # adjacency build
                       + 2 * n * F_IN_PAD * 128               # fused layer-1 matmul
                       + 2 * n * n * F1                       # layer-1 aggregation
                       + 2 * n * F1 * 128                     # fused layer-2 matmul
                       + 2 * n * n * F2                       # layer-2 aggregation
                       + 2 * n * F2 * out_pad                 # final linear
                       + 12 * n * n)),                        # [N,N] elementwise
        transcendentals=int(g * 2 * n * n),
        bytes_accessed=int(4 * (g * n * F_IN_PAD + 2 * g * e_pad
                                + SLAB_ROWS * out_pad + g * n * out_pad)),
    )

    out = pl.pallas_call(
        gat_graphnet_kernel,
        out_shape=jax.ShapeDtypeStruct((g, n, out_pad), jnp.float32),
        grid=(g,),
        in_specs=[
            pl.BlockSpec((None, n, F_IN_PAD), lambda i: (i, 0, 0)),
            pl.BlockSpec((None, e_pad, 1), lambda i: (i, 0, 0)),
            pl.BlockSpec((None, 1, e_pad), lambda i: (i, 0, 0)),
            pl.BlockSpec((SLAB_ROWS, out_pad), lambda i: (0, 0)),
        ],
        out_specs=pl.BlockSpec((None, n, out_pad), lambda i: (i, 0, 0)),
        compiler_params=pltpu.CompilerParams(
            dimension_semantics=("parallel",),
            vmem_limit_bytes=32 * 1024 * 1024,
        ),
        cost_estimate=cost,
    )(x_pad, src_col, tgt_row, slab)
    return out[:, :, :num_classes]


def gat_graphnet(x, edge_index, batch, params):
    """Single-graph wrapper matching the PyTorch forward signature.

    `batch` is accepted (signature parity) but unused by the reference forward.
    """
    del batch  # unused by the reference forward
    out = gat_graphnet_batched(x[None], edge_index[None], params)
    return out[0]


def _reference_forward(x, edge_index, params):
    """Pure-JAX dense reference of the same forward (for a correctness check)."""
    n = x.shape[0]
    src, tgt = edge_index[0], edge_index[1]
    adj = jnp.zeros((n, n), jnp.float32).at[tgt, src].add(1.0)
    eye = jnp.eye(n, dtype=bool)
    m = jnp.where(eye, 1.0, adj)
    bias = jnp.where(m > 0.0, 0.0, NEG_INF)

    def layer(h, w, a_s, a_d, b):
        hw = h @ w.T
        d = hw @ a_d[0]
        s = hw @ a_s[0]
        e = d[:, None] + s[None, :]
        e = jnp.where(e >= 0.0, e, NEG_SLOPE * e)
        e = e + bias
        e = e - e.max(-1, keepdims=True)
        p = jnp.exp(e) * m
        return (p @ hw) / p.sum(-1, keepdims=True) + b

    h1 = jax.nn.relu(layer(x, params['w1'], params['as1'], params['ad1'], params['b1']))
    h2 = layer(h1, params['w2'], params['as2'], params['ad2'], params['b2'])
    return h2 @ params['wl'].T + params['bl']


def init_params(key, num_classes=3):
    """Deterministic (glorot-uniform) synthetic parameters matching GATGraphNet."""
    ks = jax.random.split(key, 7)

    def glorot(k, shape):
        fan_out, fan_in = shape[0], shape[-1]
        lim = (6.0 / (fan_in + fan_out)) ** 0.5
        return jax.random.uniform(k, shape, jnp.float32, -lim, lim)

    return dict(
        # gat1: GATConv(11, 16) -> lin weight [16,11], att_src/att_dst [1,16], bias
        w1=glorot(ks[0], (F1, F_IN)),
        as1=glorot(ks[1], (1, F1)),
        ad1=glorot(ks[2], (1, F1)),
        b1=jnp.zeros((1, F1), jnp.float32),
        # gat2: GATConv(16, 64)
        w2=glorot(ks[3], (F2, F1)),
        as2=glorot(ks[4], (1, F2)),
        ad2=glorot(ks[5], (1, F2)),
        b2=jnp.zeros((1, F2), jnp.float32),
        # liner: Linear(64, num_classes)
        wl=glorot(ks[6], (num_classes, F2)),
        bl=jnp.zeros((1, num_classes), jnp.float32),
    )


if __name__ == "__main__":
    key = jax.random.PRNGKey(0)
    k_x, k_p = jax.random.split(key)

    N = 16            # nodes per graph
    G = 4             # graphs per batched launch
    NUM_CLASSES = 3

    # Node features [G, N, 11]
    xs = jax.random.normal(k_x, (G, N, F_IN), jnp.float32)

    # Deterministic ring graph (bidirectional): edge_index [2, 2N], row0=src, row1=tgt
    idx = jnp.arange(N, dtype=jnp.int32)
    src = jnp.concatenate([idx, (idx + 1) % N])
    tgt = jnp.concatenate([(idx + 1) % N, idx])
    edge_index = jnp.stack([src, tgt], axis=0)
    edge_indices = jnp.broadcast_to(edge_index[None], (G, 2, 2 * N))

    params = init_params(k_p, NUM_CLASSES)

    # Batched path (grid over graphs).
    out = gat_graphnet_batched(xs, edge_indices, params)
    out = jax.block_until_ready(out)
    assert out.shape == (G, N, NUM_CLASSES)

    # Single-graph signature-parity path + numerical check vs pure-JAX reference.
    batch = jnp.zeros((N,), jnp.int32)
    out0 = jax.block_until_ready(gat_graphnet(xs[0], edge_index, batch, params))
    ref0 = _reference_forward(xs[0], edge_index, params)
    assert out0.shape == (N, NUM_CLASSES)
    assert float(jnp.max(jnp.abs(out0 - ref0))) < 1e-3
    assert float(jnp.max(jnp.abs(out[0] - ref0))) < 1e-3

    print("KERNEL_OK")
</pallas_src>

<mosaic_0001>
module attributes {stable_mosaic.version = 11 : i64} {
  func.func @gat_graphnet_kernel(%arg0: i32, %arg1: memref<1x16x16xf32, #tpu.memory_space<vmem>>, %arg2: memref<1x128x1xi32, #tpu.memory_space<vmem>>, %arg3: memref<1x1x128xi32, #tpu.memory_space<vmem>>, %arg4: memref<104x128xf32, #tpu.memory_space<vmem>>, %arg5: memref<1x16x128xf32, #tpu.memory_space<vmem>>) attributes {dimension_semantics = [#tpu.dimension_semantics<parallel>], iteration_bounds = array<i64: 4>, scalar_prefetch = 0 : i64, scratch_operands = 0 : i64, tpu.core_type = #tpu.core_type<tc>, window_params = [{transform_indices = @transform_0, window_bounds = array<i64: 1, 16, 16>}, {transform_indices = @transform_1, window_bounds = array<i64: 1, 128, 1>}, {transform_indices = @transform_2, window_bounds = array<i64: 1, 1, 128>}, {pipeline_mode = #tpu.pipeline_mode<synchronous>, transform_indices = @transform_3, window_bounds = array<i64: 104, 128>}, {transform_indices = @transform_4, window_bounds = array<i64: 1, 16, 128>}]} {
    %c0 = arith.constant 0 : index
    %c0_0 = arith.constant 0 : index
    %c0_1 = arith.constant 0 : index
    %0 = vector.load %arg2[%c0, %c0_0, %c0_1] : memref<1x128x1xi32, #tpu.memory_space<vmem>>, vector<1x128x1xi32>
    %1 = vector.shape_cast %0 : vector<1x128x1xi32> to vector<128x1xi32>
    %c0_2 = arith.constant 0 : index
    %c0_3 = arith.constant 0 : index
    %c0_4 = arith.constant 0 : index
    %2 = vector.load %arg3[%c0_2, %c0_3, %c0_4] : memref<1x1x128xi32, #tpu.memory_space<vmem>>, vector<1x1x128xi32>
    %3 = vector.shape_cast %2 : vector<1x1x128xi32> to vector<1x128xi32>
    %4 = tpu.iota {dimensions = array<i32: 0>} : vector<16x128xi32>
    %5 = vector.broadcast %3 : vector<1x128xi32> to vector<16x128xi32>
    %6 = arith.cmpi eq, %4, %5 : vector<16x128xi32>
    %7 = arith.extui %6 : vector<16x128xi1> to vector<16x128xi32>
    %8 = arith.sitofp %7 : vector<16x128xi32> to vector<16x128xf32>
    %9 = arith.truncf %8 : vector<16x128xf32> to vector<16x128xbf16>
    %10 = tpu.iota {dimensions = array<i32: 1>} : vector<128x16xi32>
    %11 = vector.broadcast %1 : vector<128x1xi32> to vector<128x16xi32>
    %12 = arith.cmpi eq, %10, %11 : vector<128x16xi32>
    %13 = arith.extui %12 : vector<128x16xi1> to vector<128x16xi32>
    %14 = arith.sitofp %13 : vector<128x16xi32> to vector<128x16xf32>
    %15 = arith.truncf %14 : vector<128x16xf32> to vector<128x16xbf16>
    %cst = arith.constant dense<0.000000e+00> : vector<16x16xf32>
    %16 = tpu.matmul %9, %15, %cst {dimension_numbers = #tpu.dot_dimension_numbers<[1], [0], [0], [1], [0, 0, 1, 1], [], []>} : vector<16x128xbf16>, vector<128x16xbf16>, vector<16x16xf32> -> vector<16x16xf32>
    %17 = tpu.iota {dimensions = array<i32: 0>} : vector<16x16xi32>
    %18 = tpu.iota {dimensions = array<i32: 1>} : vector<16x16xi32>
    %19 = arith.cmpi eq, %17, %18 : vector<16x16xi32>
    %cst_5 = arith.constant 1.000000e+00 : f32
    %20 = vector.broadcast %cst_5 : f32 to vector<16x16xf32>
    %21 = arith.select %19, %20, %16 : vector<16x16xi1>, vector<16x16xf32>
    %cst_6 = arith.constant 0.000000e+00 : f32
    %22 = vector.broadcast %cst_6 : f32 to vector<16x16xf32>
    %23 = arith.cmpf ogt, %21, %22 : vector<16x16xf32>
    %cst_7 = arith.constant 0.000000e+00 : f32
    %cst_8 = arith.constant -1.000000e+30 : f32
    %24 = vector.broadcast %cst_7 : f32 to vector<16x16xf32>
    %25 = vector.broadcast %cst_8 : f32 to vector<16x16xf32>
    %26 = arith.select %23, %24, %25 : vector<16x16xi1>, vector<16x16xf32>
    %c0_9 = arith.constant 0 : index
    %c0_10 = arith.constant 0 : index
    %27 = vector.load %arg4[%c0_9, %c0_10] : memref<104x128xf32, #tpu.memory_space<vmem>>, vector<16x128xf32>
    %c16 = arith.constant 16 : index
    %c0_11 = arith.constant 0 : index
    %28 = vector.load %arg4[%c16, %c0_11] : memref<104x128xf32, #tpu.memory_space<vmem>>, vector<16x128xf32>
    %c32 = arith.constant 32 : index
    %c0_12 = arith.constant 0 : index
    %29 = vector.load %arg4[%c32, %c0_12] : memref<104x128xf32, #tpu.memory_space<vmem>>, vector<64x128xf32>
    %c96 = arith.constant 96 : index
    %c0_13 = arith.constant 0 : index
    %30 = vector.load %arg4[%c96, %c0_13] : memref<104x128xf32, #tpu.memory_space<vmem>>, vector<1x16xf32>
    %c97 = arith.constant 97 : index
    %c0_14 = arith.constant 0 : index
    %31 = vector.load %arg4[%c97, %c0_14] : memref<104x128xf32, #tpu.memory_space<vmem>>, vector<1x64xf32>
    %c98 = arith.constant 98 : index
    %c0_15 = arith.constant 0 : index
    %32 = vector.load %arg4[%c98, %c0_15] : memref<104x128xf32, #tpu.memory_space<vmem>>, vector<1x128xf32>
    %c0_16 = arith.constant 0 : index
    %c0_17 = arith.constant 0 : index
    %c0_18 = arith.constant 0 : index
    %33 = vector.load %arg1[%c0_16, %c0_17, %c0_18] : memref<1x16x16xf32, #tpu.memory_space<vmem>>, vector<1x16x16xf32>
    %34 = vector.shape_cast %33 : vector<1x16x16xf32> to vector<16x16xf32>
    %cst_19 = arith.constant dense<0.000000e+00> : vector<16x128xf32>
    %35 = tpu.matmul %34, %27, %cst_19 {dimension_numbers = #tpu.dot_dimension_numbers<[1], [0], [0], [1], [0, 0, 1, 1], [], []>} : vector<16x16xf32>, vector<16x128xf32>, vector<16x128xf32> -> vector<16x128xf32>
    %36 = vector.extract_strided_slice %35 {offsets = [0, 0], sizes = [16, 16], strides = [1, 1]} : vector<16x128xf32> to vector<16x16xf32>
    %37 = vector.extract_strided_slice %35 {offsets = [0, 16], sizes = [16, 1], strides = [1, 1]} : vector<16x128xf32> to vector<16x1xf32>
    %38 = vector.extract_strided_slice %35 {offsets = [0, 17], sizes = [16, 1], strides = [1, 1]} : vector<16x128xf32> to vector<16x1xf32>
    %39 = tpu.transpose %38, [1, 0] : vector<16x1xf32> -> vector<1x16xf32>
    %40 = vector.broadcast %37 : vector<16x1xf32> to vector<16x16xf32>
    %41 = vector.broadcast %39 : vector<1x16xf32> to vector<16x16xf32>
    %42 = arith.addf %40, %41 : vector<16x16xf32>
    %cst_20 = arith.constant 2.000000e-01 : f32
    %43 = vector.broadcast %cst_20 : f32 to vector<16x16xf32>
    %44 = arith.mulf %43, %42 : vector<16x16xf32>
    %45 = arith.maximumf %42, %44 : vector<16x16xf32>
    %46 = arith.addf %45, %26 : vector<16x16xf32>
    %cst_21 = arith.constant dense<0xFF800000> : vector<16xf32>
    %47 = vector.multi_reduction <maximumf>, %46, %cst_21 [1] : vector<16x16xf32> to vector<16xf32>
    %48 = vector.shape_cast %47 : vector<16xf32> to vector<16x1xf32>
    %49 = vector.broadcast %48 : vector<16x1xf32> to vector<16x16xf32>
    %50 = arith.subf %46, %49 : vector<16x16xf32>
    %51 = math.exp %50 : vector<16x16xf32>
    %52 = arith.mulf %51, %21 : vector<16x16xf32>
    %cst_22 = arith.constant dense<0.000000e+00> : vector<16xf32>
    %53 = vector.multi_reduction <add>, %52, %cst_22 [1] : vector<16x16xf32> to vector<16xf32>
    %54 = vector.shape_cast %53 : vector<16xf32> to vector<16x1xf32>
    %cst_23 = arith.constant dense<0.000000e+00> : vector<16x16xf32>
    %55 = tpu.matmul %52, %36, %cst_23 {dimension_numbers = #tpu.dot_dimension_numbers<[1], [0], [0], [1], [0, 0, 1, 1], [], []>} : vector<16x16xf32>, vector<16x16xf32>, vector<16x16xf32> -> vector<16x16xf32>
    %56 = vector.broadcast %54 : vector<16x1xf32> to vector<16x16xf32>
    %57 = arith.divf %55, %56 : vector<16x16xf32>
    %58 = vector.broadcast %30 : vector<1x16xf32> to vector<16x16xf32>
    %59 = arith.addf %57, %58 : vector<16x16xf32>
    %cst_24 = arith.constant 0.000000e+00 : f32
    %60 = vector.broadcast %cst_24 : f32 to vector<16x16xf32>
    %61 = arith.maximumf %59, %60 : vector<16x16xf32>
    %cst_25 = arith.constant dense<0.000000e+00> : vector<16x128xf32>
    %62 = tpu.matmul %61, %28, %cst_25 {dimension_numbers = #tpu.dot_dimension_numbers<[1], [0], [0], [1], [0, 0, 1, 1], [], []>} : vector<16x16xf32>, vector<16x128xf32>, vector<16x128xf32> -> vector<16x128xf32>
    %63 = vector.extract_strided_slice %62 {offsets = [0, 0], sizes = [16, 64], strides = [1, 1]} : vector<16x128xf32> to vector<16x64xf32>
    %64 = vector.extract_strided_slice %62 {offsets = [0, 64], sizes = [16, 1], strides = [1, 1]} : vector<16x128xf32> to vector<16x1xf32>
    %65 = vector.extract_strided_slice %62 {offsets = [0, 65], sizes = [16, 1], strides = [1, 1]} : vector<16x128xf32> to vector<16x1xf32>
    %66 = tpu.transpose %65, [1, 0] : vector<16x1xf32> -> vector<1x16xf32>
    %67 = vector.broadcast %64 : vector<16x1xf32> to vector<16x16xf32>
    %68 = vector.broadcast %66 : vector<1x16xf32> to vector<16x16xf32>
    %69 = arith.addf %67, %68 : vector<16x16xf32>
    %cst_26 = arith.constant 2.000000e-01 : f32
    %70 = vector.broadcast %cst_26 : f32 to vector<16x16xf32>
    %71 = arith.mulf %70, %69 : vector<16x16xf32>
    %72 = arith.maximumf %69, %71 : vector<16x16xf32>
    %73 = arith.addf %72, %26 : vector<16x16xf32>
    %cst_27 = arith.constant dense<0xFF800000> : vector<16xf32>
    %74 = vector.multi_reduction <maximumf>, %73, %cst_27 [1] : vector<16x16xf32> to vector<16xf32>
    %75 = vector.shape_cast %74 : vector<16xf32> to vector<16x1xf32>
    %76 = vector.broadcast %75 : vector<16x1xf32> to vector<16x16xf32>
    %77 = arith.subf %73, %76 : vector<16x16xf32>
    %78 = math.exp %77 : vector<16x16xf32>
    %79 = arith.mulf %78, %21 : vector<16x16xf32>
    %cst_28 = arith.constant dense<0.000000e+00> : vector<16xf32>
    %80 = vector.multi_reduction <add>, %79, %cst_28 [1] : vector<16x16xf32> to vector<16xf32>
    %81 = vector.shape_cast %80 : vector<16xf32> to vector<16x1xf32>
    %cst_29 = arith.constant dense<0.000000e+00> : vector<16x64xf32>
    %82 = tpu.matmul %79, %63, %cst_29 {dimension_numbers = #tpu.dot_dimension_numbers<[1], [0], [0], [1], [0, 0, 1, 1], [], []>} : vector<16x16xf32>, vector<16x64xf32>, vector<16x64xf32> -> vector<16x64xf32>
    %83 = vector.broadcast %81 : vector<16x1xf32> to vector<16x64xf32>
    %84 = arith.divf %82, %83 : vector<16x64xf32>
    %85 = vector.broadcast %31 : vector<1x64xf32> to vector<16x64xf32>
    %86 = arith.addf %84, %85 : vector<16x64xf32>
    %cst_30 = arith.constant dense<0.000000e+00> : vector<16x128xf32>
    %87 = tpu.matmul %86, %29, %cst_30 {dimension_numbers = #tpu.dot_dimension_numbers<[1], [0], [0], [1], [0, 0, 1, 1], [], []>} : vector<16x64xf32>, vector<64x128xf32>, vector<16x128xf32> -> vector<16x128xf32>
    %88 = vector.broadcast %32 : vector<1x128xf32> to vector<16x128xf32>
    %89 = arith.addf %87, %88 : vector<16x128xf32>
    %c0_31 = arith.constant 0 : index
    %c0_32 = arith.constant 0 : index
    %c0_33 = arith.constant 0 : index
    %90 = vector.load %arg5[%c0_31, %c0_32, %c0_33] : memref<1x16x128xf32, #tpu.memory_space<vmem>>, vector<1x16x128xf32>
    %91 = vector.shape_cast %90 : vector<1x16x128xf32> to vector<16x128xf32>
    %92 = vector.shape_cast %89 : vector<16x128xf32> to vector<1x16x128xf32>
    tpu.vector_store %arg5[%c0_31, %c0_32, %c0_33], %92 {strides = array<i32>} : memref<1x16x128xf32, #tpu.memory_space<vmem>>, vector<1x16x128xf32>,
    return
  }
  func.func @transform_0(%arg0: i32) -> (i32, i32, i32) {
    %c0_i32 = arith.constant 0 : i32
    %c0_i32_0 = arith.constant 0 : i32
    %c0_i32_1 = arith.constant 0 : i32
    return %arg0, %c0_i32, %c0_i32_0 : i32, i32, i32
  }
  func.func @transform_1(%arg0: i32) -> (i32, i32, i32) {
    %c0_i32 = arith.constant 0 : i32
    %c0_i32_0 = arith.constant 0 : i32
    %c0_i32_1 = arith.constant 0 : i32
    return %arg0, %c0_i32, %c0_i32_0 : i32, i32, i32
  }
  func.func @transform_2(%arg0: i32) -> (i32, i32, i32) {
    %c0_i32 = arith.constant 0 : i32
    %c0_i32_0 = arith.constant 0 : i32
    %c0_i32_1 = arith.constant 0 : i32
    return %arg0, %c0_i32, %c0_i32_0 : i32, i32, i32
  }
  func.func @transform_3(%arg0: i32) -> (i32, i32) {
    %c0_i32 = arith.constant 0 : i32
    %c0_i32_0 = arith.constant 0 : i32
    %c0_i32_1 = arith.constant 0 : i32
    return %c0_i32, %c0_i32_0 : i32, i32
  }
  func.func @transform_4(%arg0: i32) -> (i32, i32, i32) {
    %c0_i32 = arith.constant 0 : i32
    %c0_i32_0 = arith.constant 0 : i32
    %c0_i32_1 = arith.constant 0 : i32
    return %arg0, %c0_i32, %c0_i32_0 : i32, i32, i32
  }
}

</mosaic_0001>

<llo_original>
// kernel: tpu_custom_call.1
$region0: #{tpu_custom_call.1}
  #allocation0 [shape = 'u32[]', space=smem, size = 0x4, offset = 0x4, fixed_abs, tag = 'smem constant byte address 0x4 - core index']
  #allocation1 [shape = 'u32[144,128]{1,0:T(1,128)}', space=vmem, size = 0x12000, scoped, tag = 'internal scratch']
  %s0 = inlined_call_operand.vmem [shape: f32[4,16,16], index: 0, kind: input, shape index: {}]
  %s1 = inlined_call_operand.vmem [shape: s32[4,128,1], index: 1, kind: input, shape index: {}]
  %s2 = inlined_call_operand.vmem [shape: s32[4,1,128], index: 2, kind: input, shape index: {}]
  %s3 = inlined_call_operand.vmem [shape: f32[104,128], index: 3, kind: input, shape index: {}]
  %s4 = inlined_call_operand.hbm [shape: f32[4,16,128], index: 4, kind: output, shape index: {}]
  %s5 = sld [smem:[#allocation0]]
  $region49: #{tpu_custom_call.1} parent=0
    _
  %s7 = ssub.s32 1, %s5
  %s8 = scalar_select 0, %s7, %s5
  $region1: #{tpu_custom_call.1} parent=0
    #allocation2 [shape = 'u8[16384]{0}', space=vmem, size = 0x4000, scoped, tag = 'output window, operand 0']
    #allocation3 [shape = 's32[2]{0}', space=sflag, size = 0x8, scoped, tag = 'scoped memory for tpu_custom_call.1']
    %9 = vsyncpa [#allocation3], 0
    %s10 = scalar_lea.sflag [#allocation3], 1
    %11 = vsyncpa %s10, 0
    loop: start=0, step=1, limit=6
    $region2: #{tpu_custom_call.1} parent=1 // loop_pre_header
      _
    $region3: #{tpu_custom_call.1} parent=1 // loop_header
      %s13 = sphi 0, %s17
      %p14 = scmp.ge.s32.totalorder %s13, 6
      %s23 = sphi 0, %s25
      %s26 = sphi 0, %s23
      %s27 = sphi 0, %s26
      %s43 = sphi 0, %s27
      %s49 = sphi 0, %s51
      %s52 = sphi 0, %s49
      %s53 = sphi 0, %s52
      %s69 = sphi 0, %s53
      %s75 = sphi 0, %s77
      %s78 = sphi 0, %s75
      %s79 = sphi 0, %s78
      %s95 = sphi 0, %s79
      %s99 = sphi 0, %s99
      %s101 = sphi 0, %s99
      %s102 = sphi 0, %s101
      %s116 = sphi 0, %s102
      %s122 = sphi 0, %s124
      %s125 = sphi 0, %s122
      %s126 = sphi 0, %s125
      %s142 = sphi 0, %s126
    $region4: #{tpu_custom_call.1} parent=1 // loop_header_branch
      %16 = sbr.rel (%p14) target = $region8
    $region5: #{tpu_custom_call.1} parent=1 // loop_body
      %s18 = ssub.s32 %s13, 1
      %s19 = ssub.s32 %s13, 2
      %s20 = sadd.s32 %s13, 1
      %s21 = ssub.s32 %s13, %s20
      %p22 = scmp.eq.s32.totalorder %s21, 0
      %s24 = sadd.s32 %s23, 1
      %s25 = scalar_select %p22, %s23, %s24
      %p28 = pneg %p22
      %p29 = scmp.eq.s32.totalorder %s13, 3
      %p30 = por %p28, %p29
      %p31 = scmp.ne.s32.totalorder %s23, %s26
      %p32 = scmp.eq.s32.totalorder %s13, 0
      %p33 = por %p31, %p32
      %p34 = scmp.ne.s32.totalorder %s23, %s26
      %p35 = scmp.eq.s32.totalorder %s18, 3
      %p36 = por %p34, %p35
      %p37 = scmp.ne.s32.totalorder %s26, %s27
      %p38 = scmp.eq.s32.totalorder %s18, 0
      %p39 = por %p37, %p38
      %p40 = scmp.ne.s32.totalorder %s26, %s27
      %p41 = scmp.eq.s32.totalorder %s19, 3
      %p42 = por %p40, %p41
      %p44 = scmp.ne.s32.totalorder %s27, %s43
      %p45 = scmp.eq.s32.totalorder %s19, 0
      %p46 = por %p44, %p45
      %s47 = ssub.s32 %s13, %s20
      %p48 = scmp.eq.s32.totalorder %s47, 0
      %s50 = sadd.s32 %s49, 1
      %s51 = scalar_select %p48, %s49, %s50
      %p54 = pneg %p48
      %p55 = scmp.eq.s32.totalorder %s13, 3
      %p56 = por %p54, %p55
      %p57 = scmp.ne.s32.totalorder %s49, %s52
      %p58 = scmp.eq.s32.totalorder %s13, 0
      %p59 = por %p57, %p58
      %p60 = scmp.ne.s32.totalorder %s49, %s52
      %p61 = scmp.eq.s32.totalorder %s18, 3
      %p62 = por %p60, %p61
      %p63 = scmp.ne.s32.totalorder %s52, %s53
      %p64 = scmp.eq.s32.totalorder %s18, 0
      %p65 = por %p63, %p64
      %p66 = scmp.ne.s32.totalorder %s52, %s53
      %p67 = scmp.eq.s32.totalorder %s19, 3
      %p68 = por %p66, %p67
      %p70 = scmp.ne.s32.totalorder %s53, %s69
      %p71 = scmp.eq.s32.totalorder %s19, 0
      %p72 = por %p70, %p71
      %s73 = ssub.s32 %s13, %s20
      %p74 = scmp.eq.s32.totalorder %s73, 0
      %s76 = sadd.s32 %s75, 1
      %s77 = scalar_select %p74, %s75, %s76
      %p80 = pneg %p74
      %p81 = scmp.eq.s32.totalorder %s13, 3
      %p82 = por %p80, %p81
      %p83 = scmp.ne.s32.totalorder %s75, %s78
      %p84 = scmp.eq.s32.totalorder %s13, 0
      %p85 = por %p83, %p84
      %p86 = scmp.ne.s32.totalorder %s75, %s78
      %p87 = scmp.eq.s32.totalorder %s18, 3
      %p88 = por %p86, %p87
      %p89 = scmp.ne.s32.totalorder %s78, %s79
      %p90 = scmp.eq.s32.totalorder %s18, 0
      %p91 = por %p89, %p90
      %p92 = scmp.ne.s32.totalorder %s78, %s79
      %p93 = scmp.eq.s32.totalorder %s19, 3
      %p94 = por %p92, %p93
      %p96 = scmp.ne.s32.totalorder %s79, %s95
      %p97 = scmp.eq.s32.totalorder %s19, 0
      %p98 = por %p96, %p97
      %s100 = sadd.s32 %s99, 1
      %p103 = scmp.eq.s32.totalorder %s13, 3
      %p104 = scmp.ne.s32.totalorder %s99, %s101
      %p105 = scmp.eq.s32.totalorder %s13, 0
      %p106 = por %p104, %p105
      %p107 = scmp.ne.s32.totalorder %s99, %s101
      %p108 = scmp.eq.s32.totalorder %s18, 3
      %p109 = por %p107, %p108
      %p110 = scmp.ne.s32.totalorder %s101, %s102
      %p111 = scmp.eq.s32.totalorder %s18, 0
      %p112 = por %p110, %p111
      %p113 = scmp.ne.s32.totalorder %s101, %s102
      %p114 = scmp.eq.s32.totalorder %s19, 3
      %p115 = por %p113, %p114
      %p117 = scmp.ne.s32.totalorder %s102, %s116
      %p118 = scmp.eq.s32.totalorder %s19, 0
      %p119 = por %p117, %p118
      %s120 = ssub.s32 %s13, %s20
      %p121 = scmp.eq.s32.totalorder %s120, 0
      %s123 = sadd.s32 %s122, 1
      %s124 = scalar_select %p121, %s122, %s123
      %p127 = pneg %p121
      %p128 = scmp.eq.s32.totalorder %s13, 3
      %p129 = por %p127, %p128
      %p130 = scmp.ne.s32.totalorder %s122, %s125
      %p131 = scmp.eq.s32.totalorder %s13, 0
      %p132 = por %p130, %p131
      %p133 = scmp.ne.s32.totalorder %s122, %s125
      %p134 = scmp.eq.s32.totalorder %s18, 3
      %p135 = por %p133, %p134
      %p136 = scmp.ne.s32.totalorder %s125, %s126
      %p137 = scmp.eq.s32.totalorder %s18, 0
      %p138 = por %p136, %p137
      %p139 = scmp.ne.s32.totalorder %s125, %s126
      %p140 = scmp.eq.s32.totalorder %s19, 3
      %p141 = por %p139, %p140
      %p143 = scmp.ne.s32.totalorder %s126, %s142
      %p144 = scmp.eq.s32.totalorder %s19, 0
      %p145 = por %p143, %p144
      %p146 = scmp.le.s32.totalorder 1, %s13
      %p147 = scmp.lt.s32.totalorder %s13, 5
      %p148 = pnand %p146, %p147
      %p149 = pneg %p148
      // Predicated region
      $region9: #{tpu_custom_call.1} parent=5 // pred_check
        _
      $region10: #{tpu_custom_call.1} parent=5 // pred_check_branch
        %151 = sbr.rel (%p148) target = $region12
      $region11: #{tpu_custom_call.1} parent=5 // pred_region
        %s152 = ssub.s32 %s13, 1
        // Predicated region
        $region13: #{tpu_custom_call.1} parent=11 // pred_check
          %p153 = pneg %p112
        $region14: #{tpu_custom_call.1} parent=11 // pred_check_branch
          %155 = sbr.rel (%p153) target = $region16
        $region15: #{tpu_custom_call.1} parent=11 // pred_region
          _
        $region16: #{tpu_custom_call.1} parent=11 // pred_fallthru
          _
      $region12: #{tpu_custom_call.1} parent=5 // pred_fallthru
        _
      %p156 = scmp.lt.s32.totalorder %s13, 4
      // Predicated region
      $region17: #{tpu_custom_call.1} parent=5 // pred_check
        %p157 = pneg %p156
      $region18: #{tpu_custom_call.1} parent=5 // pred_check_branch
        %159 = sbr.rel (%p157) target = $region20
      $region19: #{tpu_custom_call.1} parent=5 // pred_region
        // Predicated region
        $region21: #{tpu_custom_call.1} parent=19 // pred_check
          %p160 = pneg %p33
        $region22: #{tpu_custom_call.1} parent=19 // pred_check_branch
          %162 = sbr.rel (%p160) target = $region24
        $region23: #{tpu_custom_call.1} parent=19 // pred_region
          %p163 = scmp.lt.s32.totalorder %s13, 3
          %s164 = scalar_select %p163, %s13, 3
          %s165 = smul.addr %s164, 2
          %s166 = smul.addr %s165, 8
          %s167 = scalar_lea.vmem %s0, %s166
        $region24: #{tpu_custom_call.1} parent=19 // pred_fallthru
          _
        // Predicated region
        $region25: #{tpu_custom_call.1} parent=19 // pred_check
          %p168 = pneg %p59
        $region26: #{tpu_custom_call.1} parent=19 // pred_check_branch
          %170 = sbr.rel (%p168) target = $region28
        $region27: #{tpu_custom_call.1} parent=19 // pred_region
          %p171 = scmp.lt.s32.totalorder %s13, 3
          %s172 = scalar_select %p171, %s13, 3
          %s173 = smul.addr %s172, 16
          %s174 = smul.addr %s173, 8
          %s175 = scalar_lea.vmem %s1, %s174
        $region28: #{tpu_custom_call.1} parent=19 // pred_fallthru
          _
        // Predicated region
        $region29: #{tpu_custom_call.1} parent=19 // pred_check
          %p176 = pneg %p85
        $region30: #{tpu_custom_call.1} parent=19 // pred_check_branch
          %178 = sbr.rel (%p176) target = $region32
        $region31: #{tpu_custom_call.1} parent=19 // pred_region
          %p179 = scmp.lt.s32.totalorder %s13, 3
          %s180 = scalar_select %p179, %s13, 3
          %s181 = scalar_lea.vmem %s2, %s180
        $region32: #{tpu_custom_call.1} parent=19 // pred_fallthru
          _
      $region20: #{tpu_custom_call.1} parent=5 // pred_fallthru
        _
      %p182 = scmp.le.s32.totalorder 1, %s13
      %p183 = scmp.lt.s32.totalorder %s13, 5
      %p184 = pnand %p182, %p183
      %p185 = pneg %p184
      // Predicated region
      $region33: #{tpu_custom_call.1} parent=5 // pred_check
        _
      $region34: #{tpu_custom_call.1} parent=5 // pred_check_branch
        %187 = sbr.rel (%p184) target = $region36
      $region35: #{tpu_custom_call.1} parent=5 // pred_region
        %s188 = ssub.s32 %s13, 1
        %p189 = scmp.lt.s32.totalorder %s18, 3
        %s190 = scalar_select %p189, %s18, 3
        %s191 = smul.addr %s190, 2
        %s192 = smul.addr %s191, 8
        %s193 = scalar_lea.vmem %s0, %s192
        %p194 = pneg %p39
        %p195 = pneg %p36
        %p196 = scmp.lt.s32.totalorder %s18, 3
        %s197 = scalar_select %p196, %s18, 3
        %s198 = smul.addr %s197, 16
        %s199 = smul.addr %s198, 8
        %s200 = scalar_lea.vmem %s1, %s199
        %p201 = pneg %p65
        %p202 = pneg %p62
        %p203 = scmp.lt.s32.totalorder %s18, 3
        %s204 = scalar_select %p203, %s18, 3
        %s205 = scalar_lea.vmem %s2, %s204
        %p206 = pneg %p91
        %p207 = pneg %p88
        %p208 = pneg %p112
        %p209 = pneg %p109
        %p210 = pneg %p138
        %p211 = pneg %p135
        %s212 = sand.u32 %s125, 1
        %s213 = scalar_lea.sflag [#allocation3], %s212
        %s214 = sand.u32 %s125, 1
        %s215 = smul.addr %s214, 16
        %s216 = scalar_lea.vmem [#allocation2], %s215
        %p217 = scmp.lt.s32.totalorder %s18, 3
        %s218 = scalar_select %p217, %s18, 3
        %s219 = smul.addr %s218, 2
        %s220 = smul.addr %s219, 8
        %s221 = scalar_lea.vmem %s0, %s220
        %p222 = scmp.lt.s32.totalorder %s18, 3
        %s223 = scalar_select %p222, %s18, 3
        %s224 = smul.addr %s223, 16
        %s225 = smul.addr %s224, 8
        %s226 = scalar_lea.vmem %s1, %s225
        %p227 = scmp.lt.s32.totalorder %s18, 3
        %s228 = scalar_select %p227, %s18, 3
        %s229 = scalar_lea.vmem %s2, %s228
        %v231 = vld [vmem:[%s226] sm:$0xff]
        %v232 = vld [vmem:[%s226 + $0x8] sm:$0xff]
        %v233 = vld [vmem:[%s226 + $0x10] sm:$0xff]
        %v234 = vld [vmem:[%s226 + $0x18] sm:$0xff]
        %v235 = vld [vmem:[%s226 + $0x20] sm:$0xff]
        %v236 = vld [vmem:[%s226 + $0x28] sm:$0xff]
        %v237 = vld [vmem:[%s226 + $0x30] sm:$0xff]
        %v238 = vld [vmem:[%s226 + $0x38] sm:$0xff]
        %v239 = vld [vmem:[%s226 + $0x40] sm:$0xff]
        %v240 = vld [vmem:[%s226 + $0x48] sm:$0xff]
        %v241 = vld [vmem:[%s226 + $0x50] sm:$0xff]
        %v242 = vld [vmem:[%s226 + $0x58] sm:$0xff]
        %v243 = vld [vmem:[%s226 + $0x60] sm:$0xff]
        %v244 = vld [vmem:[%s226 + $0x68] sm:$0xff]
        %v245 = vld [vmem:[%s226 + $0x70] sm:$0xff]
        %v246 = vld [vmem:[%s226 + $0x78] sm:$0xff]
        %v247 = vld [vmem:[%s229] sm:$0x1]
        %v248 = vlaneseq
        %v249 = vshrl.u32 %v248, 7
        %v250 = vadd.s32 %v249, 8
        %v251 = vlaneseq
        %v252 = vshrl.u32 %v251, 7
        %v253 = vsub.s32 0, %v252
        %v254 = vrot.slane %v247, %v253
        %vm255 = vcmp.eq.s32.totalorder %v249, %v254
        %vm256 = vcmp.eq.s32.totalorder %v250, %v254
        %v257 = vsel %vm255, 1, 0
        %v258 = vsel %vm256, 1, 0
        %v259 = vcvt.s32.f32 %v257
        %v260 = vcvt.s32.f32 %v258
        %v261 = vpack.c.bf16 %v260, %v259
        %v262 = vlaneseq
        %v263 = vand.u32 %v262, 127
        %264 = vset.pattern.permute.xlu0 0
        %265 = vperm.xlu0 %264, %v231
        %v266 = vpop.permute.xlu0 %265
        %267 = vset.pattern.permute.xlu0 0
        %268 = vperm.xlu0 %267, %v232
        %v269 = vpop.permute.xlu0 %268
        %270 = vset.pattern.permute.xlu0 0
        %271 = vperm.xlu0 %270, %v233
        %v272 = vpop.permute.xlu0 %271
        %273 = vset.pattern.permute.xlu0 0
        %274 = vperm.xlu0 %273, %v234
        %v275 = vpop.permute.xlu0 %274
        %276 = vset.pattern.permute.xlu0 0
        %277 = vperm.xlu0 %276, %v235
        %v278 = vpop.permute.xlu0 %277
        %279 = vset.pattern.permute.xlu0 0
        %280 = vperm.xlu0 %279, %v236
        %v281 = vpop.permute.xlu0 %280
        %282 = vset.pattern.permute.xlu0 0
        %283 = vperm.xlu0 %282, %v237
        %v284 = vpop.permute.xlu0 %283
        %285 = vset.pattern.permute.xlu0 0
        %286 = vperm.xlu0 %285, %v238
        %v287 = vpop.permute.xlu0 %286
        %288 = vset.pattern.permute.xlu0 0
        %289 = vperm.xlu0 %288, %v239
        %v290 = vpop.permute.xlu0 %289
        %291 = vset.pattern.permute.xlu0 0
        %292 = vperm.xlu0 %291, %v240
        %v293 = vpop.permute.xlu0 %292
        %294 = vset.pattern.permute.xlu0 0
        %295 = vperm.xlu0 %294, %v241
        %v296 = vpop.permute.xlu0 %295
        %297 = vset.pattern.permute.xlu0 0
        %298 = vperm.xlu0 %297, %v242
        %v299 = vpop.permute.xlu0 %298
        %300 = vset.pattern.permute.xlu0 0
        %301 = vperm.xlu0 %300, %v243
        %v302 = vpop.permute.xlu0 %301
        %303 = vset.pattern.permute.xlu0 0
        %304 = vperm.xlu0 %303, %v244
        %v305 = vpop.permute.xlu0 %304
        %306 = vset.pattern.permute.xlu0 0
        %307 = vperm.xlu0 %306, %v245
        %v308 = vpop.permute.xlu0 %307
        %309 = vset.pattern.permute.xlu0 0
        %310 = vperm.xlu0 %309, %v246
        %v311 = vpop.permute.xlu0 %310
        %vm312 = vcmp.eq.s32.totalorder %v263, %v266
        %vm313 = vcmp.eq.s32.totalorder %v263, %v269
        %vm314 = vcmp.eq.s32.totalorder %v263, %v272
        %vm315 = vcmp.eq.s32.totalorder %v263, %v275
        %vm316 = vcmp.eq.s32.totalorder %v263, %v278
        %vm317 = vcmp.eq.s32.totalorder %v263, %v281
        %vm318 = vcmp.eq.s32.totalorder %v263, %v284
        %vm319 = vcmp.eq.s32.totalorder %v263, %v287
        %vm320 = vcmp.eq.s32.totalorder %v263, %v290
        %vm321 = vcmp.eq.s32.totalorder %v263, %v293
        %vm322 = vcmp.eq.s32.totalorder %v263, %v296
        %vm323 = vcmp.eq.s32.totalorder %v263, %v299
        %vm324 = vcmp.eq.s32.totalorder %v263, %v302
        %vm325 = vcmp.eq.s32.totalorder %v263, %v305
        %vm326 = vcmp.eq.s32.totalorder %v263, %v308
        %vm327 = vcmp.eq.s32.totalorder %v263, %v311
        %v328 = vsel %vm312, 1, 0
        %v329 = vsel %vm313, 1, 0
        %v330 = vsel %vm314, 1, 0
        %v331 = vsel %vm315, 1, 0
        %v332 = vsel %vm316, 1, 0
        %v333 = vsel %vm317, 1, 0
        %v334 = vsel %vm318, 1, 0
        %v335 = vsel %vm319, 1, 0
        %v336 = vsel %vm320, 1, 0
        %v337 = vsel %vm321, 1, 0
        %v338 = vsel %vm322, 1, 0
        %v339 = vsel %vm323, 1, 0
        %v340 = vsel %vm324, 1, 0
        %v341 = vsel %vm325, 1, 0
        %v342 = vsel %vm326, 1, 0
        %v343 = vsel %vm327, 1, 0
        %v344 = vcvt.s32.f32 %v328
        %v345 = vcvt.s32.f32 %v329
        %v346 = vcvt.s32.f32 %v330
        %v347 = vcvt.s32.f32 %v331
        %v348 = vcvt.s32.f32 %v332
        %v349 = vcvt.s32.f32 %v333
        %v350 = vcvt.s32.f32 %v334
        %v351 = vcvt.s32.f32 %v335
        %v352 = vcvt.s32.f32 %v336
        %v353 = vcvt.s32.f32 %v337
        %v354 = vcvt.s32.f32 %v338
        %v355 = vcvt.s32.f32 %v339
        %v356 = vcvt.s32.f32 %v340
        %v357 = vcvt.s32.f32 %v341
        %v358 = vcvt.s32.f32 %v342
        %v359 = vcvt.s32.f32 %v343
        %v360 = vpack.c.bf16 %v345, %v344
        %v361 = vpack.c.bf16 %v347, %v346
        %v362 = vpack.c.bf16 %v349, %v348
        %v363 = vpack.c.bf16 %v351, %v350
        %v364 = vpack.c.bf16 %v353, %v352
        %v365 = vpack.c.bf16 %v355, %v354
        %v366 = vpack.c.bf16 %v357, %v356
        %v367 = vpack.c.bf16 %v359, %v358
        %368 = vmatprep.subr.bf16.mxu0 0
        %369 = vmatpush1.bf16.msra.mxu0 %v360
        %370 = vmatprep.subr.bf16.mxu0 0
        %371 = vmatpush1.bf16.msra.mxu0 %v361
        %372 = vmatprep.subr.bf16.mxu0 0
        %373 = vmatpush1.bf16.msra.mxu0 %v362
        %374 = vmatprep.subr.bf16.mxu0 0
        %375 = vmatpush1.bf16.msra.mxu0 %v363
        %376 = vmatprep.subr.bf16.mxu0 0
        %377 = vmatpush1.bf16.msra.mxu0 %v364
        %378 = vmatprep.subr.bf16.mxu0 0
        %379 = vmatpush1.bf16.msra.mxu0 %v365
        %380 = vmatprep.subr.bf16.mxu0 0
        %381 = vmatpush1.bf16.msra.mxu0 %v366
        %382 = vmatprep.subr.bf16.mxu0 0
        %383 = vmatpush1.bf16.msra.mxu0 %v367
        %384 = vmatprep.subr.bf16.mxu0 0
        %385 = vmatpush1.bf16.msra.mxu0 0
        %386 = vmatprep.subr.bf16.mxu0 0
        %387 = vmatpush1.bf16.msra.mxu0 0
        %388 = vmatprep.subr.bf16.mxu0 0
        %389 = vmatpush1.bf16.msra.mxu0 0
        %390 = vmatprep.subr.bf16.mxu0 0
        %391 = vmatpush1.bf16.msra.mxu0 0
        %392 = vmatprep.subr.bf16.mxu0 0
        %393 = vmatpush1.bf16.msra.mxu0 0
        %394 = vmatprep.subr.bf16.mxu0 0
        %395 = vmatpush1.bf16.msra.mxu0 0
        %396 = vmatprep.subr.bf16.mxu0 0
        %397 = vmatpush1.bf16.msra.mxu0 0
        %398 = vmatprep.subr.bf16.mxu0 0
        %399 = vmatpush1.bf16.msra.mxu0 0
        %400 = vmatprep.mubr.bf16.mxu0 0
        %401 = vmatmul.mubr.bf16.gmra.mrb[0].mxu0 %v261
        %v402 = vpop.f32.mrb[0].mxu0
        %v403 = vadd.f32 0.0, %v402
        %v404 = vpop.f32.mrb[0].mxu0
        %v405 = vpop.f32.mrb[0].mxu0
        %v406 = vadd.f32 0.0, %v405
        %v407 = vpop.f32.mrb[0].mxu0
        %408 = vdwg.mxu0
        %vm409 = vcmp.eq.s32.totalorder %v249, %v263
        %vm410 = vcmp.eq.s32.totalorder %v250, %v263
        %v411 = vsel %vm409, 1.0, %v403
        %v412 = vsel %vm410, 1.0, %v406
        %vm413 = vcmp.gt.f32.partialorder %v411, 0.0
        %vm414 = vcmp.gt.f32.partialorder %v412, 0.0
        %v415 = vsel %vm413, 0.0, -1e+30
        %v416 = vsel %vm414, 0.0, -1e+30
        %v417 = vld [vmem:[%s3] sm:$0xff]
        %v418 = vld [vmem:[%s3 + $0x8] sm:$0xff]
        %v419 = vld [vmem:[%s3 + $0x10] sm:$0xff]
        %v420 = vld [vmem:[%s3 + $0x18] sm:$0xff]
        %v421 = vld [vmem:[%s3 + $0x20] sm:$0xff]
        %v422 = vld [vmem:[%s3 + $0x28] sm:$0xff]
        %v423 = vld [vmem:[%s3 + $0x30] sm:$0xff]
        %v424 = vld [vmem:[%s3 + $0x38] sm:$0xff]
        %v425 = vld [vmem:[%s3 + $0x40] sm:$0xff]
        %v426 = vld [vmem:[%s3 + $0x48] sm:$0xff]
        %v427 = vld [vmem:[%s3 + $0x50] sm:$0xff]
        %v428 = vld [vmem:[%s3 + $0x58] sm:$0xff]
        %v429 = vld [vmem:[%s3 + $0x60] sm:$0x1]
        %v430 = vld [vmem:[%s3 + $0x61] sm:$0x1]
        %v431 = vld [vmem:[%s3 + $0x62] sm:$0x1]
        %v432 = vld [vmem:[%s221] sm:$0xff]
        %v433 = vld [vmem:[%s221 + $0x8] sm:$0xff]
        %vm434 = vcmask 130048
        %v436 = vsel %vm434, %v432, 0
        %v439 = vsel %vm434, %v433, 0
        %441 = vmatprep.subr.mxu0 0.0
        %442 = vmatpush1.msra.mxu0 %v417
        %443 = vmatprep.subr.mxu0 0.0
        %444 = vmatpush1.msra.mxu0 %v418
        %445 = vmatprep.subr.mxu0 0.0
        %446 = vmatpush1.msra.mxu0 0.0
        %447 = vmatprep.subr.mxu0 0.0
        %448 = vmatpush1.msra.mxu0 0.0
        %449 = vmatprep.subr.mxu0 0.0
        %450 = vmatpush1.msra.mxu0 0.0
        %451 = vmatprep.subr.mxu0 0.0
        %452 = vmatpush1.msra.mxu0 0.0
        %453 = vmatprep.subr.mxu0 0.0
        %454 = vmatpush1.msra.mxu0 0.0
        %455 = vmatprep.subr.mxu0 0.0
        %456 = vmatpush1.msra.mxu0 0.0
        %457 = vmatprep.subr.mxu0 0.0
        %458 = vmatpush1.msra.mxu0 0.0
        %459 = vmatprep.subr.mxu0 0.0
        %460 = vmatpush1.msra.mxu0 0.0
        %461 = vmatprep.subr.mxu0 0.0
        %462 = vmatpush1.msra.mxu0 0.0
        %463 = vmatprep.subr.mxu0 0.0
        %464 = vmatpush1.msra.mxu0 0.0
        %465 = vmatprep.subr.mxu0 0.0
        %466 = vmatpush1.msra.mxu0 0.0
        %467 = vmatprep.subr.mxu0 0.0
        %468 = vmatpush1.msra.mxu0 0.0
        %469 = vmatprep.subr.mxu0 0.0
        %470 = vmatpush1.msra.mxu0 0.0
        %471 = vmatprep.subr.mxu0 0.0
        %472 = vmatpush1.msra.mxu0 0.0
        %473 = vmatprep.subr.mxu0 0.0
        %474 = vmatpush1.msra.mxu0 0.0
        %475 = vmatprep.subr.mxu0 0.0
        %476 = vmatpush1.msra.mxu0 0.0
        %477 = vmatprep.subr.mxu0 0.0
        %478 = vmatpush1.msra.mxu0 0.0
        %479 = vmatprep.subr.mxu0 0.0
        %480 = vmatpush1.msra.mxu0 0.0
        %481 = vmatprep.subr.mxu0 0.0
        %482 = vmatpush1.msra.mxu0 0.0
        %483 = vmatprep.subr.mxu0 0.0
        %484 = vmatpush1.msra.mxu0 0.0
        %485 = vmatprep.subr.mxu0 0.0
        %486 = vmatpush1.msra.mxu0 0.0
        %487 = vmatprep.subr.mxu0 0.0
        %488 = vmatpush1.msra.mxu0 0.0
        %489 = vmatprep.subr.mxu0 0.0
        %490 = vmatpush1.msra.mxu0 0.0
        %491 = vmatprep.subr.mxu0 0.0
        %492 = vmatpush1.msra.mxu0 0.0
        %493 = vmatprep.subr.mxu0 0.0
        %494 = vmatpush1.msra.mxu0 0.0
        %495 = vmatprep.subr.mxu0 0.0
        %496 = vmatpush1.msra.mxu0 0.0
        %497 = vmatprep.subr.mxu0 0.0
        %498 = vmatpush1.msra.mxu0 0.0
        %499 = vmatprep.subr.mxu0 0.0
        %500 = vmatpush1.msra.mxu0 0.0
        %501 = vmatprep.subr.mxu0 0.0
        %502 = vmatpush1.msra.mxu0 0.0
        %503 = vmatprep.subr.mxu0 0.0
        %504 = vmatpush1.msra.mxu0 0.0
        %505 = vmatprep.mubr.f32.mxu0 0.0
        %506 = vmatmul.mubr.f32.gmra.mrb[0].mxu0 %v436
        %v507 = vpop.f32.mrb[0].mxu0
        %v508 = vadd.f32 0.0, %v507
        %v509 = vpop.f32.mrb[0].mxu0
        %510 = vmatprep.mubr.f32.mxu0 0.0
        %511 = vmatmul.mubr.f32.gmra.mrb[0].mxu0 %v439
        %v512 = vpop.f32.mrb[0].mxu0
        %v513 = vadd.f32 0.0, %v512
        %v514 = vpop.f32.mrb[0].mxu0
        %515 = vdwg.mxu0
        %518 = vrot.lane.b32.xlu0 %v508, 111
        %v519 = vpop.permute.xlu0 %518
        %520 = vrot.lane.b32.xlu0 %v513, 111
        %v521 = vpop.permute.xlu0 %520
        %524 = vxpose.xlu0.b32.start [1/16] %v519, 128
        %525 = vxpose.xlu0.b32.cont [2/16] %v521, 128
        %526 = vxpose.xlu0.b32.cont [3/16] 0.0, 128
        %527 = vxpose.xlu0.b32.cont [4/16] 0.0, 128
        %528 = vxpose.xlu0.b32.cont [5/16] 0.0, 128
        %529 = vxpose.xlu0.b32.cont [6/16] 0.0, 128
        %530 = vxpose.xlu0.b32.cont [7/16] 0.0, 128
        %531 = vxpose.xlu0.b32.cont [8/16] 0.0, 128
        %532 = vxpose.xlu0.b32.cont [9/16] 0.0, 128
        %533 = vxpose.xlu0.b32.cont [10/16] 0.0, 128
        %534 = vxpose.xlu0.b32.cont [11/16] 0.0, 128
        %535 = vxpose.xlu0.b32.cont [12/16] 0.0, 128
        %536 = vxpose.xlu0.b32.cont [13/16] 0.0, 128
        %537 = vxpose.xlu0.b32.cont [14/16] 0.0, 128
        %538 = vxpose.xlu0.b32.cont [15/16] 0.0, 128
        %539 = vxpose.xlu0.b32.end [16/16] 0.0, 128
        %v540 = vpop.trf.xlu0
        %v541 = vpop.trf.xlu0
        %v542 = vpop.trf.xlu0
        %v543 = vpop.trf.xlu0
        %v544 = vpop.trf.xlu0
        %v545 = vpop.trf.xlu0
        %v546 = vpop.trf.xlu0
        %v547 = vpop.trf.xlu0
        %v548 = vpop.trf.xlu0
        %v549 = vpop.trf.xlu0
        %v550 = vpop.trf.xlu0
        %v551 = vpop.trf.xlu0
        %v552 = vpop.trf.xlu0
        %v553 = vpop.trf.xlu0
        %v554 = vpop.trf.xlu0
        %v555 = vpop.trf.xlu0
        %556 = vset.pattern.permute.xlu0 16
        %557 = vperm.xlu0 %556, %v508
        %v558 = vpop.permute.xlu0 %557
        %560 = vset.pattern.permute.xlu0 16
        %561 = vperm.xlu0 %560, %v513
        %v562 = vpop.permute.xlu0 %561
        %v564 = vlaneseq
        %v565 = vshrl.u32 %v564, 7
        %v566 = vsub.s32 0, %v565
        %v567 = vrot.slane %v540, %v566
        %v568 = vadd.f32 %v558, %v567
        %v569 = vadd.f32 %v562, %v567
        %v570 = vmul.f32 %v568, 0.2
        %v571 = vmul.f32 %v569, 0.2
        %v572 = vmax.f32 %v568, %v570
        %v573 = vmax.f32 %v569, %v571
        %v574 = vadd.f32 %v572, %v415
        %v575 = vadd.f32 %v573, %v416
        %v576 = vsel %vm434, %v574, -inf
        %577 = vmax.xlane.f32.xlu0 %v576
        %v578 = vpop.xlane.xlu0 %577
        %v579 = vsel %vm434, %v575, -inf
        %580 = vmax.xlane.f32.xlu0 %v579
        %v581 = vpop.xlane.xlu0 %580
        %v582 = vsub.f32 %v574, %v578
        %v583 = vsub.f32 %v575, %v581
        %v584 = vmul.f32 %v582, 1.442695
        %v585 = vpow.pop %v584
        %v586 = vmul.f32 %v583, 1.442695
        %v587 = vpow.pop %v586
        %v588 = vmul.f32 %v585, %v411
        %v589 = vmul.f32 %v587, %v412
        %v590 = vsel %vm434, %v588, 0.0
        %591 = vadd.xlane.f32.xlu0 %v590
        %v592 = vpop.xlane.xlu0 %591
        %v593 = vsel %vm434, %v589, 0.0
        %594 = vadd.xlane.f32.xlu0 %v593
        %v595 = vpop.xlane.xlu0 %594
        %v597 = vsel %vm434, %v588, 0
        %v600 = vsel %vm434, %v589, 0
        %602 = vmatprep.subr.mxu0 0.0
        %603 = vmatpush1.msra.mxu0 %v508
        %604 = vmatprep.subr.mxu0 0.0
        %605 = vmatpush1.msra.mxu0 %v513
        %606 = vmatprep.subr.mxu0 0.0
        %607 = vmatpush1.msra.mxu0 0.0
        %608 = vmatprep.subr.mxu0 0.0
        %609 = vmatpush1.msra.mxu0 0.0
        %610 = vmatprep.subr.mxu0 0.0
        %611 = vmatpush1.msra.mxu0 0.0
        %612 = vmatprep.subr.mxu0 0.0
        %613 = vmatpush1.msra.mxu0 0.0
        %614 = vmatprep.subr.mxu0 0.0
        %615 = vmatpush1.msra.mxu0 0.0
        %616 = vmatprep.subr.mxu0 0.0
        %617 = vmatpush1.msra.mxu0 0.0
        %618 = vmatprep.subr.mxu0 0.0
        %619 = vmatpush1.msra.mxu0 0.0
        %620 = vmatprep.subr.mxu0 0.0
        %621 = vmatpush1.msra.mxu0 0.0
        %622 = vmatprep.subr.mxu0 0.0
        %623 = vmatpush1.msra.mxu0 0.0
        %624 = vmatprep.subr.mxu0 0.0
        %625 = vmatpush1.msra.mxu0 0.0
        %626 = vmatprep.subr.mxu0 0.0
        %627 = vmatpush1.msra.mxu0 0.0
        %628 = vmatprep.subr.mxu0 0.0
        %629 = vmatpush1.msra.mxu0 0.0
        %630 = vmatprep.subr.mxu0 0.0
        %631 = vmatpush1.msra.mxu0 0.0
        %632 = vmatprep.subr.mxu0 0.0
        %633 = vmatpush1.msra.mxu0 0.0
        %634 = vmatprep.subr.mxu0 0.0
        %635 = vmatpush1.msra.mxu0 0.0
        %636 = vmatprep.subr.mxu0 0.0
        %637 = vmatpush1.msra.mxu0 0.0
        %638 = vmatprep.subr.mxu0 0.0
        %639 = vmatpush1.msra.mxu0 0.0
        %640 = vmatprep.subr.mxu0 0.0
        %641 = vmatpush1.msra.mxu0 0.0
        %642 = vmatprep.subr.mxu0 0.0
        %643 = vmatpush1.msra.mxu0 0.0
        %644 = vmatprep.subr.mxu0 0.0
        %645 = vmatpush1.msra.mxu0 0.0
        %646 = vmatprep.subr.mxu0 0.0
        %647 = vmatpush1.msra.mxu0 0.0
        %648 = vmatprep.subr.mxu0 0.0
        %649 = vmatpush1.msra.mxu0 0.0
        %650 = vmatprep.subr.mxu0 0.0
        %651 = vmatpush1.msra.mxu0 0.0
        %652 = vmatprep.subr.mxu0 0.0
        %653 = vmatpush1.msra.mxu0 0.0
        %654 = vmatprep.subr.mxu0 0.0
        %655 = vmatpush1.msra.mxu0 0.0
        %656 = vmatprep.subr.mxu0 0.0
        %657 = vmatpush1.msra.mxu0 0.0
        %658 = vmatprep.subr.mxu0 0.0
        %659 = vmatpush1.msra.mxu0 0.0
        %660 = vmatprep.subr.mxu0 0.0
        %661 = vmatpush1.msra.mxu0 0.0
        %662 = vmatprep.subr.mxu0 0.0
        %663 = vmatpush1.msra.mxu0 0.0
        %664 = vmatprep.subr.mxu0 0.0
        %665 = vmatpush1.msra.mxu0 0.0
        %666 = vmatprep.mubr.f32.mxu0 0.0
        %667 = vmatmul.mubr.f32.gmra.mrb[0].mxu0 %v597
        %v668 = vpop.f32.mrb[0].mxu0
        %v669 = vadd.f32 0.0, %v668
        %v670 = vpop.f32.mrb[0].mxu0
        %671 = vmatprep.mubr.f32.mxu0 0.0
        %672 = vmatmul.mubr.f32.gmra.mrb[0].mxu0 %v600
        %v673 = vpop.f32.mrb[0].mxu0
        %v674 = vadd.f32 0.0, %v673
        %v675 = vpop.f32.mrb[0].mxu0
        %676 = vdwg.mxu0
        %v677 = vrcp.pop %v592
        %v678 = vmul.f32 %v669, %v677
        %v679 = vrcp.pop %v595
        %v680 = vmul.f32 %v674, %v679
        %v681 = vlaneseq
        %v682 = vshrl.u32 %v681, 7
        %v683 = vsub.s32 0, %v682
        %v684 = vrot.slane %v429, %v683
        %v685 = vadd.f32 %v678, %v684
        %v686 = vadd.f32 %v680, %v684
        %v687 = vmax.f32 %v685, 0.0
        %v688 = vmax.f32 %v686, 0.0
        %v690 = vsel %vm434, %v687, 0
        %v693 = vsel %vm434, %v688, 0
        %695 = vmatprep.subr.mxu0 0.0
        %696 = vmatpush1.msra.mxu0 %v419
        %697 = vmatprep.subr.mxu0 0.0
        %698 = vmatpush1.msra.mxu0 %v420
        %699 = vmatprep.subr.mxu0 0.0
        %700 = vmatpush1.msra.mxu0 0.0
        %701 = vmatprep.subr.mxu0 0.0
        %702 = vmatpush1.msra.mxu0 0.0
        %703 = vmatprep.subr.mxu0 0.0
        %704 = vmatpush1.msra.mxu0 0.0
        %705 = vmatprep.subr.mxu0 0.0
        %706 = vmatpush1.msra.mxu0 0.0
        %707 = vmatprep.subr.mxu0 0.0
        %708 = vmatpush1.msra.mxu0 0.0
        %709 = vmatprep.subr.mxu0 0.0
        %710 = vmatpush1.msra.mxu0 0.0
        %711 = vmatprep.subr.mxu0 0.0
        %712 = vmatpush1.msra.mxu0 0.0
        %713 = vmatprep.subr.mxu0 0.0
        %714 = vmatpush1.msra.mxu0 0.0
        %715 = vmatprep.subr.mxu0 0.0
        %716 = vmatpush1.msra.mxu0 0.0
        %717 = vmatprep.subr.mxu0 0.0
        %718 = vmatpush1.msra.mxu0 0.0
        %719 = vmatprep.subr.mxu0 0.0
        %720 = vmatpush1.msra.mxu0 0.0
        %721 = vmatprep.subr.mxu0 0.0
        %722 = vmatpush1.msra.mxu0 0.0
        %723 = vmatprep.subr.mxu0 0.0
        %724 = vmatpush1.msra.mxu0 0.0
        %725 = vmatprep.subr.mxu0 0.0
        %726 = vmatpush1.msra.mxu0 0.0
        %727 = vmatprep.subr.mxu0 0.0
        %728 = vmatpush1.msra.mxu0 0.0
        %729 = vmatprep.subr.mxu0 0.0
        %730 = vmatpush1.msra.mxu0 0.0
        %731 = vmatprep.subr.mxu0 0.0
        %732 = vmatpush1.msra.mxu0 0.0
        %733 = vmatprep.subr.mxu0 0.0
        %734 = vmatpush1.msra.mxu0 0.0
        %735 = vmatprep.subr.mxu0 0.0
        %736 = vmatpush1.msra.mxu0 0.0
        %737 = vmatprep.subr.mxu0 0.0
        %738 = vmatpush1.msra.mxu0 0.0
        %739 = vmatprep.subr.mxu0 0.0
        %740 = vmatpush1.msra.mxu0 0.0
        %741 = vmatprep.subr.mxu0 0.0
        %742 = vmatpush1.msra.mxu0 0.0
        %743 = vmatprep.subr.mxu0 0.0
        %744 = vmatpush1.msra.mxu0 0.0
        %745 = vmatprep.subr.mxu0 0.0
        %746 = vmatpush1.msra.mxu0 0.0
        %747 = vmatprep.subr.mxu0 0.0
        %748 = vmatpush1.msra.mxu0 0.0
        %749 = vmatprep.subr.mxu0 0.0
        %750 = vmatpush1.msra.mxu0 0.0
        %751 = vmatprep.subr.mxu0 0.0
        %752 = vmatpush1.msra.mxu0 0.0
        %753 = vmatprep.subr.mxu0 0.0
        %754 = vmatpush1.msra.mxu0 0.0
        %755 = vmatprep.subr.mxu0 0.0
        %756 = vmatpush1.msra.mxu0 0.0
        %757 = vmatprep.subr.mxu0 0.0
        %758 = vmatpush1.msra.mxu0 0.0
        %759 = vmatprep.mubr.f32.mxu0 0.0
        %760 = vmatmul.mubr.f32.gmra.mrb[0].mxu0 %v690
        %v761 = vpop.f32.mrb[0].mxu0
        %v762 = vadd.f32 0.0, %v761
        %v763 = vpop.f32.mrb[0].mxu0
        %764 = vmatprep.mubr.f32.mxu0 0.0
        %765 = vmatmul.mubr.f32.gmra.mrb[0].mxu0 %v693
        %v766 = vpop.f32.mrb[0].mxu0
        %v767 = vadd.f32 0.0, %v766
        %v768 = vpop.f32.mrb[0].mxu0
        %769 = vdwg.mxu0
        %772 = vrot.lane.b32.xlu0 %v762, 63
        %v773 = vpop.permute.xlu0 %772
        %774 = vrot.lane.b32.xlu0 %v767, 63
        %v775 = vpop.permute.xlu0 %774
        %778 = vxpose.xlu0.b32.start [1/16] %v773, 128
        %779 = vxpose.xlu0.b32.cont [2/16] %v775, 128
        %780 = vxpose.xlu0.b32.cont [3/16] 0.0, 128
        %781 = vxpose.xlu0.b32.cont [4/16] 0.0, 128
        %782 = vxpose.xlu0.b32.cont [5/16] 0.0, 128
        %783 = vxpose.xlu0.b32.cont [6/16] 0.0, 128
        %784 = vxpose.xlu0.b32.cont [7/16] 0.0, 128
        %785 = vxpose.xlu0.b32.cont [8/16] 0.0, 128
        %786 = vxpose.xlu0.b32.cont [9/16] 0.0, 128
        %787 = vxpose.xlu0.b32.cont [10/16] 0.0, 128
        %788 = vxpose.xlu0.b32.cont [11/16] 0.0, 128
        %789 = vxpose.xlu0.b32.cont [12/16] 0.0, 128
        %790 = vxpose.xlu0.b32.cont [13/16] 0.0, 128
        %791 = vxpose.xlu0.b32.cont [14/16] 0.0, 128
        %792 = vxpose.xlu0.b32.cont [15/16] 0.0, 128
        %793 = vxpose.xlu0.b32.end [16/16] 0.0, 128
        %v794 = vpop.trf.xlu0
        %v795 = vpop.trf.xlu0
        %v796 = vpop.trf.xlu0
        %v797 = vpop.trf.xlu0
        %v798 = vpop.trf.xlu0
        %v799 = vpop.trf.xlu0
        %v800 = vpop.trf.xlu0
        %v801 = vpop.trf.xlu0
        %v802 = vpop.trf.xlu0
        %v803 = vpop.trf.xlu0
        %v804 = vpop.trf.xlu0
        %v805 = vpop.trf.xlu0
        %v806 = vpop.trf.xlu0
        %v807 = vpop.trf.xlu0
        %v808 = vpop.trf.xlu0
        %v809 = vpop.trf.xlu0
        %810 = vset.pattern.permute.xlu0 64
        %811 = vperm.xlu0 %810, %v762
        %v812 = vpop.permute.xlu0 %811
        %814 = vset.pattern.permute.xlu0 64
        %815 = vperm.xlu0 %814, %v767
        %v816 = vpop.permute.xlu0 %815
        %v818 = vlaneseq
        %v819 = vshrl.u32 %v818, 7
        %v820 = vsub.s32 0, %v819
        %v821 = vrot.slane %v794, %v820
        %v822 = vadd.f32 %v812, %v821
        %v823 = vadd.f32 %v816, %v821
        %v824 = vmul.f32 %v822, 0.2
        %v825 = vmul.f32 %v823, 0.2
        %v826 = vmax.f32 %v822, %v824
        %v827 = vmax.f32 %v823, %v825
        %v828 = vadd.f32 %v826, %v415
        %v829 = vadd.f32 %v827, %v416
        %v830 = vsel %vm434, %v828, -inf
        %831 = vmax.xlane.f32.xlu0 %v830
        %v832 = vpop.xlane.xlu0 %831
        %v833 = vsel %vm434, %v829, -inf
        %834 = vmax.xlane.f32.xlu0 %v833
        %v835 = vpop.xlane.xlu0 %834
        %v836 = vsub.f32 %v828, %v832
        %v837 = vsub.f32 %v829, %v835
        %v838 = vmul.f32 %v836, 1.442695
        %v839 = vpow.pop %v838
        %v840 = vmul.f32 %v837, 1.442695
        %v841 = vpow.pop %v840
        %v842 = vmul.f32 %v839, %v411
        %v843 = vmul.f32 %v841, %v412
        %v844 = vsel %vm434, %v842, 0.0
        %845 = vadd.xlane.f32.xlu0 %v844
        %v846 = vpop.xlane.xlu0 %845
        %v847 = vsel %vm434, %v843, 0.0
        %848 = vadd.xlane.f32.xlu0 %v847
        %v849 = vpop.xlane.xlu0 %848
        %v851 = vsel %vm434, %v842, 0
        %v854 = vsel %vm434, %v843, 0
        %856 = vmatprep.subr.mxu0 0.0
        %857 = vmatpush1.msra.mxu0 %v762
        %858 = vmatprep.subr.mxu0 0.0
        %859 = vmatpush1.msra.mxu0 %v767
        %860 = vmatprep.subr.mxu0 0.0
        %861 = vmatpush1.msra.mxu0 0.0
        %862 = vmatprep.subr.mxu0 0.0
        %863 = vmatpush1.msra.mxu0 0.0
        %864 = vmatprep.subr.mxu0 0.0
        %865 = vmatpush1.msra.mxu0 0.0
        %866 = vmatprep.subr.mxu0 0.0
        %867 = vmatpush1.msra.mxu0 0.0
        %868 = vmatprep.subr.mxu0 0.0
        %869 = vmatpush1.msra.mxu0 0.0
        %870 = vmatprep.subr.mxu0 0.0
        %871 = vmatpush1.msra.mxu0 0.0
        %872 = vmatprep.subr.mxu0 0.0
        %873 = vmatpush1.msra.mxu0 0.0
        %874 = vmatprep.subr.mxu0 0.0
        %875 = vmatpush1.msra.mxu0 0.0
        %876 = vmatprep.subr.mxu0 0.0
        %877 = vmatpush1.msra.mxu0 0.0
        %878 = vmatprep.subr.mxu0 0.0
        %879 = vmatpush1.msra.mxu0 0.0
        %880 = vmatprep.subr.mxu0 0.0
        %881 = vmatpush1.msra.mxu0 0.0
        %882 = vmatprep.subr.mxu0 0.0
        %883 = vmatpush1.msra.mxu0 0.0
        %884 = vmatprep.subr.mxu0 0.0
        %885 = vmatpush1.msra.mxu0 0.0
        %886 = vmatprep.subr.mxu0 0.0
        %887 = vmatpush1.msra.mxu0 0.0
        %888 = vmatprep.subr.mxu0 0.0
        %889 = vmatpush1.msra.mxu0 0.0
        %890 = vmatprep.subr.mxu0 0.0
        %891 = vmatpush1.msra.mxu0 0.0
        %892 = vmatprep.subr.mxu0 0.0
        %893 = vmatpush1.msra.mxu0 0.0
        %894 = vmatprep.subr.mxu0 0.0
        %895 = vmatpush1.msra.mxu0 0.0
        %896 = vmatprep.subr.mxu0 0.0
        %897 = vmatpush1.msra.mxu0 0.0
        %898 = vmatprep.subr.mxu0 0.0
        %899 = vmatpush1.msra.mxu0 0.0
        %900 = vmatprep.subr.mxu0 0.0
        %901 = vmatpush1.msra.mxu0 0.0
        %902 = vmatprep.subr.mxu0 0.0
        %903 = vmatpush1.msra.mxu0 0.0
        %904 = vmatprep.subr.mxu0 0.0
        %905 = vmatpush1.msra.mxu0 0.0
        %906 = vmatprep.subr.mxu0 0.0
        %907 = vmatpush1.msra.mxu0 0.0
        %908 = vmatprep.subr.mxu0 0.0
        %909 = vmatpush1.msra.mxu0 0.0
        %910 = vmatprep.subr.mxu0 0.0
        %911 = vmatpush1.msra.mxu0 0.0
        %912 = vmatprep.subr.mxu0 0.0
        %913 = vmatpush1.msra.mxu0 0.0
        %914 = vmatprep.subr.mxu0 0.0
        %915 = vmatpush1.msra.mxu0 0.0
        %916 = vmatprep.subr.mxu0 0.0
        %917 = vmatpush1.msra.mxu0 0.0
        %918 = vmatprep.subr.mxu0 0.0
        %919 = vmatpush1.msra.mxu0 0.0
        %920 = vmatprep.mubr.f32.mxu0 0.0
        %921 = vmatmul.mubr.f32.gmra.mrb[0].mxu0 %v851
        %v922 = vpop.f32.mrb[0].mxu0
        %v923 = vadd.f32 0.0, %v922
        %v924 = vpop.f32.mrb[0].mxu0
        %925 = vmatprep.mubr.f32.mxu0 0.0
        %926 = vmatmul.mubr.f32.gmra.mrb[0].mxu0 %v854
        %v927 = vpop.f32.mrb[0].mxu0
        %v928 = vadd.f32 0.0, %v927
        %v929 = vpop.f32.mrb[0].mxu0
        %930 = vdwg.mxu0
        %v931 = vrcp.pop %v846
        %v932 = vmul.f32 %v923, %v931
        %v933 = vrcp.pop %v849
        %v934 = vmul.f32 %v928, %v933
        %v935 = vlaneseq
        %v936 = vshrl.u32 %v935, 7
        %v937 = vsub.s32 0, %v936
        %v938 = vrot.slane %v430, %v937
        %v939 = vadd.f32 %v932, %v938
        %v940 = vadd.f32 %v934, %v938
        %v941 = vlaneseq
        %v942 = vshrl.u32 %v941, 7
        %v943 = vsub.s32 0, %v942
        %v944 = vrot.slane %v431, %v943
        %vm945 = vcmask 523264
        %v947 = vsel %vm945, %v939, 0
        %v950 = vsel %vm945, %v940, 0
        %952 = vmatprep.subr.mxu0 0.0
        %953 = vmatpush1.msra.mxu0 %v421
        %954 = vmatprep.subr.mxu0 0.0
        %955 = vmatpush1.msra.mxu0 %v422
        %956 = vmatprep.subr.mxu0 0.0
        %957 = vmatpush1.msra.mxu0 %v423
        %958 = vmatprep.subr.mxu0 0.0
        %959 = vmatpush1.msra.mxu0 %v424
        %960 = vmatprep.subr.mxu0 0.0
        %961 = vmatpush1.msra.mxu0 %v425
        %962 = vmatprep.subr.mxu0 0.0
        %963 = vmatpush1.msra.mxu0 %v426
        %964 = vmatprep.subr.mxu0 0.0
        %965 = vmatpush1.msra.mxu0 %v427
        %966 = vmatprep.subr.mxu0 0.0
        %967 = vmatpush1.msra.mxu0 %v428
        %968 = vmatprep.subr.mxu0 0.0
        %969 = vmatpush1.msra.mxu0 0.0
        %970 = vmatprep.subr.mxu0 0.0
        %971 = vmatpush1.msra.mxu0 0.0
        %972 = vmatprep.subr.mxu0 0.0
        %973 = vmatpush1.msra.mxu0 0.0
        %974 = vmatprep.subr.mxu0 0.0
        %975 = vmatpush1.msra.mxu0 0.0
        %976 = vmatprep.subr.mxu0 0.0
        %977 = vmatpush1.msra.mxu0 0.0
        %978 = vmatprep.subr.mxu0 0.0
        %979 = vmatpush1.msra.mxu0 0.0
        %980 = vmatprep.subr.mxu0 0.0
        %981 = vmatpush1.msra.mxu0 0.0
        %982 = vmatprep.subr.mxu0 0.0
        %983 = vmatpush1.msra.mxu0 0.0
        %984 = vmatprep.subr.mxu0 0.0
        %985 = vmatpush1.msra.mxu0 0.0
        %986 = vmatprep.subr.mxu0 0.0
        %987 = vmatpush1.msra.mxu0 0.0
        %988 = vmatprep.subr.mxu0 0.0
        %989 = vmatpush1.msra.mxu0 0.0
        %990 = vmatprep.subr.mxu0 0.0
        %991 = vmatpush1.msra.mxu0 0.0
        %992 = vmatprep.subr.mxu0 0.0
        %993 = vmatpush1.msra.mxu0 0.0
        %994 = vmatprep.subr.mxu0 0.0
        %995 = vmatpush1.msra.mxu0 0.0
        %996 = vmatprep.subr.mxu0 0.0
        %997 = vmatpush1.msra.mxu0 0.0
        %998 = vmatprep.subr.mxu0 0.0
        %999 = vmatpush1.msra.mxu0 0.0
        %1000 = vmatprep.subr.mxu0 0.0
        %1001 = vmatpush1.msra.mxu0 0.0
        %1002 = vmatprep.subr.mxu0 0.0
        %1003 = vmatpush1.msra.mxu0 0.0
        %1004 = vmatprep.subr.mxu0 0.0
        %1005 = vmatpush1.msra.mxu0 0.0
        %1006 = vmatprep.subr.mxu0 0.0
        %1007 = vmatpush1.msra.mxu0 0.0
        %1008 = vmatprep.subr.mxu0 0.0
        %1009 = vmatpush1.msra.mxu0 0.0
        %1010 = vmatprep.subr.mxu0 0.0
        %1011 = vmatpush1.msra.mxu0 0.0
        %1012 = vmatprep.subr.mxu0 0.0
        %1013 = vmatpush1.msra.mxu0 0.0
        %1014 = vmatprep.subr.mxu0 0.0
        %1015 = vmatpush1.msra.mxu0 0.0
        %1016 = vmatprep.mubr.f32.mxu0 0.0
        %1017 = vmatmul.mubr.f32.gmra.mrb[0].mxu0 %v947
        %v1018 = vpop.f32.mrb[0].mxu0
        %v1019 = vadd.f32 %v944, %v1018
        %v1020 = vpop.f32.mrb[0].mxu0
        %1021 = vmatprep.mubr.f32.mxu0 0.0
        %1022 = vmatmul.mubr.f32.gmra.mrb[0].mxu0 %v950
        %v1023 = vpop.f32.mrb[0].mxu0
        %v1024 = vadd.f32 %v944, %v1023
        %v1025 = vpop.f32.mrb[0].mxu0
        %1026 = vdwg.mxu0
        %1027 = vst [vmem:[%s216] sm:$0xff] %v1019
        %1028 = vst [vmem:[%s216 + $0x8] sm:$0xff] %v1024
        %s1029 = sand.u32 %s125, 1
        %s1030 = scalar_lea.sflag [#allocation3], %s1029
        %s1031 = sand.u32 %s125, 1
        %s1032 = smul.addr %s1031, 16
        %s1033 = scalar_lea.vmem [#allocation2], %s1032
        // Predicated region
        $region37: #{tpu_custom_call.1} parent=35 // pred_check
          %p1034 = pneg %p135
        $region38: #{tpu_custom_call.1} parent=35 // pred_check_branch
          %1036 = sbr.rel (%p1034) target = $region40
        $region39: #{tpu_custom_call.1} parent=35 // pred_region
          %s1038 = ssub.s32 256, 256
          %1039 = vsyncadd %s1030, %s1038
          %s1040 = smul.addr %s18, 2
          %s1041 = smul.addr %s1040, 128
          %s1042 = scalar_lea.hbm %s4, %s1041
          %s1043 = sshll.u32 %s1033, 4
          %s1044 = int_to_ptr.vmem [resolvable:$true] %s1043
          %1049 = dma.vmem_to_hbm [thread:$0]  %s1044, 256, %s1042, %s1030, 128, 128, 8
        $region40: #{tpu_custom_call.1} parent=35 // pred_fallthru
          _
      $region36: #{tpu_custom_call.1} parent=5 // pred_fallthru
        _
      %p1050 = scmp.le.s32.totalorder 2, %s13
      // Predicated region
      $region41: #{tpu_custom_call.1} parent=5 // pred_check
        %p1051 = pneg %p1050
      $region42: #{tpu_custom_call.1} parent=5 // pred_check_branch
        %1053 = sbr.rel (%p1051) target = $region44
      $region43: #{tpu_custom_call.1} parent=5 // pred_region
        %s1054 = ssub.s32 %s13, 2
        // Predicated region
        $region45: #{tpu_custom_call.1} parent=43 // pred_check
          %p1055 = pneg %p141
        $region46: #{tpu_custom_call.1} parent=43 // pred_check_branch
          %1057 = sbr.rel (%p1055) target = $region48
        $region47: #{tpu_custom_call.1} parent=43 // pred_region
          %s1058 = sand.u32 %s126, 1
          %s1059 = scalar_lea.sflag [#allocation3], %s1058
          %s1060 = sand.u32 %s126, 1
          %s1061 = smul.addr %s1060, 16
          %s1062 = scalar_lea.vmem [#allocation2], %s1061
          %1063 = dma.done %s1059, 256
        $region48: #{tpu_custom_call.1} parent=43 // pred_fallthru
          _
      $region44: #{tpu_custom_call.1} parent=5 // pred_fallthru
        _
    $region6: #{tpu_custom_call.1} parent=1 // loop_footer
      %s17 = sadd.s32 1, %s13
    $region7: #{tpu_custom_call.1} parent=1 // loop_footer_branch
      %12 = sbr.rel target = $region3
    $region8: #{tpu_custom_call.1} parent=1 // loop_exit
      _
    %1064 = vsyncpa [#allocation3], 1
    %s1065 = scalar_lea.sflag [#allocation3], 1
    %1066 = vsyncpa %s1065, 1

</llo_original>
